<compile_context>
chip_gen: v5e
topology: v5e:2x2
jax: 0.10.0
libtpu: 0.0.40
codegen_flags: <defaults>
</compile_context>

<pallas_src>
import functools

import jax
import jax.numpy as jnp
from jax.experimental import pallas as pl
from jax.experimental.pallas import tpu as pltpu


def gru_fc_kernel(x_ref, wih_ref, whh_ref, bih_ref, bhn_ref,
                  wfc_ref, bfc_ref, out_ref, *, seq_len, batch_p, hidden):
    """Whole GRU recurrence + FC head in one invocation.

    x_ref   : (T*Bp, I)   time-major rows (row = t*Bp + b), batch padded to Bp
    wih_ref : (I,  Hc)    W_ih^T, gates compact [r|z|n] in 3H cols, padded to Hc
    whh_ref : (H,  Hc)    W_hh^T, compact, padded to Hc
    bih_ref : (1,  Hc)    b_ih with b_hh's r/z blocks folded in, padded
    bhn_ref : (1,  H)     b_hn (n-gate hidden bias; must stay inside r*(...))
    wfc_ref : (H,  Op)    W_fc^T, padded to Op lanes
    bfc_ref : (1,  Op)    b_fc, padded
    out_ref : (Bp, Op)    FC head output (lane-dense), sliced in the wrapper
    """
    T, Bp, H = seq_len, batch_p, hidden

    # (1) Input projection for ALL timesteps: one MXU matmul, biases folded.
    #     Held as a value (8 vregs at these shapes) -- no VMEM scratch.
    gi_all = (jnp.dot(x_ref[...], wih_ref[...],
                      preferred_element_type=jnp.float32)
              + bih_ref[...])                                   # (T*Bp, Hc)

    whh = whh_ref[...]                                          # loop-invariant RHS
    bhn = jnp.broadcast_to(bhn_ref[...], (Bp, H))               # broadcast hoisted

    # (2) Serial recurrence, fully unrolled; h carried in vregs at width H.
    h = jnp.zeros((Bp, H), jnp.float32)
    for t in range(T):
        gi = gi_all[t * Bp:(t + 1) * Bp, :]                     # (8,128)-tile-aligned
        gh = jnp.dot(h, whh, preferred_element_type=jnp.float32)  # (Bp, Hc), 1 MXU tile
        i_r, i_z, i_n = gi[:, 0:H], gi[:, H:2 * H], gi[:, 2 * H:3 * H]
        h_r, h_z, h_n = gh[:, 0:H], gh[:, H:2 * H], gh[:, 2 * H:3 * H]
        r = jax.nn.sigmoid(i_r + h_r)           # b_ir + b_hr already folded into i_r
        z = jax.nn.sigmoid(i_z + h_z)           # b_iz + b_hz already folded into i_z
        n = jnp.tanh(i_n + r * (h_n + bhn))     # b_hn stays inside r*(...) -- GRU rule
        h = (1.0 - z) * n + z * h

    # (3) Linear head on the final hidden state (lane-dense padded store).
    out_ref[...] = (jnp.dot(h, wfc_ref[...],
                            preferred_element_type=jnp.float32)
                    + bfc_ref[...])


def prepare_gru_fc_params(w_ih, w_hh, b_ih, b_hh, w_fc, b_fc):
    """One-time parameter prep (padding, transposes, bias folding)."""
    f32 = jnp.float32
    LANE = 128
    H = w_hh.shape[1]
    I = w_ih.shape[1]
    O = w_fc.shape[0]
    assert w_ih.shape == (3 * H, I)
    assert w_hh.shape == (3 * H, H)
    assert b_ih.shape == (3 * H,)
    assert b_hh.shape == (3 * H,)
    assert w_fc.shape == (O, H)
    assert b_fc.shape == (O,)

    Hc = pl.cdiv(3 * H, LANE) * LANE            # compact gate block, lane aligned
    Op = pl.cdiv(O, LANE) * LANE                # head width, lane-dense store

    wih_c = jnp.zeros((I, Hc), f32).at[:, :3 * H].set(w_ih.T.astype(f32))
    whh_c = jnp.zeros((H, Hc), f32).at[:, :3 * H].set(w_hh.T.astype(f32))
    # Fold the r/z blocks of b_hh into b_ih; keep b_hn separate (inside r*()).
    b_fold = b_ih.astype(f32).at[:2 * H].add(b_hh[:2 * H].astype(f32))
    bih_c = jnp.zeros((1, Hc), f32).at[0, :3 * H].set(b_fold)
    bhn_c = b_hh[2 * H:3 * H].astype(f32).reshape(1, H)
    wfc_p = jnp.zeros((H, Op), f32).at[:, :O].set(w_fc.T.astype(f32))
    bfc_p = jnp.zeros((1, Op), f32).at[0, :O].set(b_fc.astype(f32))
    return (wih_c, whh_c, bih_c, bhn_c, wfc_p, bfc_p)


@functools.partial(jax.jit, static_argnames=("out_dim",))
def gru_fc_forward(x, params, *, out_dim):
    """x: (B, T, I) batch_first, like the PyTorch module. Returns (B, out_dim)."""
    wih_c, whh_c, bih_c, bhn_c, wfc_p, bfc_p = params
    B, T, I = x.shape
    H, Hc = whh_c.shape
    Op = wfc_p.shape[1]
    f32 = jnp.float32
    SUBLANE = 8
    Bp = pl.cdiv(B, SUBLANE) * SUBLANE          # batch padded to sublane multiple

    # Time-major, batch-padded, flattened rows: row index = t*Bp + b.
    x_tb = jnp.transpose(x, (1, 0, 2)).astype(f32)            # (T, B, I)
    x_tb = jnp.pad(x_tb, ((0, 0), (0, Bp - B), (0, 0)))       # (T, Bp, I)
    x2d = x_tb.reshape(T * Bp, I)

    kernel = functools.partial(gru_fc_kernel, seq_len=T, batch_p=Bp, hidden=H)

    out_p = pl.pallas_call(
        kernel,
        out_shape=jax.ShapeDtypeStruct((Bp, Op), f32),
        grid=(1,),                              # single invocation; recurrence in-kernel
        in_specs=[
            pl.BlockSpec((T * Bp, I), lambda i: (0, 0)),   # x (time-major rows)
            pl.BlockSpec((I, Hc), lambda i: (0, 0)),       # W_ih^T (compact)
            pl.BlockSpec((H, Hc), lambda i: (0, 0)),       # W_hh^T (compact)
            pl.BlockSpec((1, Hc), lambda i: (0, 0)),       # folded b_ih
            pl.BlockSpec((1, H), lambda i: (0, 0)),        # b_hn
            pl.BlockSpec((H, Op), lambda i: (0, 0)),       # W_fc^T
            pl.BlockSpec((1, Op), lambda i: (0, 0)),       # b_fc
        ],
        out_specs=pl.BlockSpec((Bp, Op), lambda i: (0, 0)),
        compiler_params=pltpu.CompilerParams(
            dimension_semantics=("arbitrary",)),
    )(x2d, wih_c, whh_c, bih_c, bhn_c, wfc_p, bfc_p)

    return out_p[:B, :out_dim]


def gru_fc_reference(x, w_ih, w_hh, b_ih, b_hh, w_fc, b_fc):
    """Pure-JAX reference matching torch.nn.GRU + Linear semantics."""
    B, T, I = x.shape
    H = w_hh.shape[1]

    def step(h, x_t):
        gi = x_t @ w_ih.T + b_ih
        gh = h @ w_hh.T + b_hh
        i_r, i_z, i_n = gi[:, :H], gi[:, H:2 * H], gi[:, 2 * H:]
        h_r, h_z, h_n = gh[:, :H], gh[:, H:2 * H], gh[:, 2 * H:]
        r = jax.nn.sigmoid(i_r + h_r)
        z = jax.nn.sigmoid(i_z + h_z)
        n = jnp.tanh(i_n + r * h_n)
        h_new = (1.0 - z) * n + z * h
        return h_new, None

    h0 = jnp.zeros((B, H), jnp.float32)
    h_final, _ = jax.lax.scan(step, h0, jnp.transpose(x, (1, 0, 2)))
    return h_final @ w_fc.T + b_fc


if __name__ == "__main__":
    # Small shapes consistent with the module's forward.
    batch_size = 4
    seq_len = 8
    input_size = 16
    hidden_size = 32
    output_size = 8

    key = jax.random.PRNGKey(0)
    ks = jax.random.split(key, 8)
    bound = 1.0 / jnp.sqrt(hidden_size)

    # GRU parameters (PyTorch layout: (3H, in), gate order r, z, n).
    w_ih = jax.random.uniform(ks[0], (3 * hidden_size, input_size),
                              minval=-bound, maxval=bound, dtype=jnp.float32)
    w_hh = jax.random.uniform(ks[1], (3 * hidden_size, hidden_size),
                              minval=-bound, maxval=bound, dtype=jnp.float32)
    b_ih = jax.random.uniform(ks[2], (3 * hidden_size,),
                              minval=-bound, maxval=bound, dtype=jnp.float32)
    b_hh = jax.random.uniform(ks[3], (3 * hidden_size,),
                              minval=-bound, maxval=bound, dtype=jnp.float32)
    # Linear head parameters.
    w_fc = jax.random.uniform(ks[4], (output_size, hidden_size),
                              minval=-bound, maxval=bound, dtype=jnp.float32)
    b_fc = jax.random.uniform(ks[5], (output_size,),
                              minval=-bound, maxval=bound, dtype=jnp.float32)

    # Input x: (B, T, I), batch_first like the PyTorch module.
    x = jax.random.normal(ks[6], (batch_size, seq_len, input_size),
                          dtype=jnp.float32)

    # One-time parameter prep (padding/transpose/bias folding), then the
    # jitted Pallas forward.
    params = jax.tree.map(jax.block_until_ready,
                          prepare_gru_fc_params(w_ih, w_hh, b_ih, b_hh,
                                                w_fc, b_fc))
    out = gru_fc_forward(x, params, out_dim=output_size)
    out = jax.block_until_ready(out)

    ref = gru_fc_reference(x, w_ih, w_hh, b_ih, b_hh, w_fc, b_fc)
    assert out.shape == (batch_size, output_size)
    assert jnp.allclose(out, ref, atol=1e-5, rtol=1e-5), (out, ref)

    print("KERNEL_OK")
</pallas_src>

<mosaic_0001>
module attributes {stable_mosaic.version = 11 : i64} {
  func.func @gru_fc_kernel(%arg0: i32, %arg1: memref<64x16xf32, #tpu.memory_space<vmem>>, %arg2: memref<16x128xf32, #tpu.memory_space<vmem>>, %arg3: memref<32x128xf32, #tpu.memory_space<vmem>>, %arg4: memref<1x128xf32, #tpu.memory_space<vmem>>, %arg5: memref<1x32xf32, #tpu.memory_space<vmem>>, %arg6: memref<32x128xf32, #tpu.memory_space<vmem>>, %arg7: memref<1x128xf32, #tpu.memory_space<vmem>>, %arg8: memref<8x128xf32, #tpu.memory_space<vmem>>) attributes {dimension_semantics = [#tpu.dimension_semantics<arbitrary>], iteration_bounds = array<i64: 1>, scalar_prefetch = 0 : i64, scratch_operands = 0 : i64, tpu.core_type = #tpu.core_type<tc>, window_params = [{pipeline_mode = #tpu.pipeline_mode<synchronous>, transform_indices = @transform_0, window_bounds = array<i64: 64, 16>}, {pipeline_mode = #tpu.pipeline_mode<synchronous>, transform_indices = @transform_1, window_bounds = array<i64: 16, 128>}, {pipeline_mode = #tpu.pipeline_mode<synchronous>, transform_indices = @transform_2, window_bounds = array<i64: 32, 128>}, {pipeline_mode = #tpu.pipeline_mode<synchronous>, transform_indices = @transform_3, window_bounds = array<i64: 1, 128>}, {pipeline_mode = #tpu.pipeline_mode<synchronous>, transform_indices = @transform_4, window_bounds = array<i64: 1, 32>}, {pipeline_mode = #tpu.pipeline_mode<synchronous>, transform_indices = @transform_5, window_bounds = array<i64: 32, 128>}, {pipeline_mode = #tpu.pipeline_mode<synchronous>, transform_indices = @transform_6, window_bounds = array<i64: 1, 128>}, {pipeline_mode = #tpu.pipeline_mode<synchronous>, transform_indices = @transform_7, window_bounds = array<i64: 8, 128>}]} {
    %c0 = arith.constant 0 : index
    %c0_0 = arith.constant 0 : index
    %0 = vector.load %arg1[%c0, %c0_0] : memref<64x16xf32, #tpu.memory_space<vmem>>, vector<64x16xf32>
    %c0_1 = arith.constant 0 : index
    %c0_2 = arith.constant 0 : index
    %1 = vector.load %arg2[%c0_1, %c0_2] : memref<16x128xf32, #tpu.memory_space<vmem>>, vector<16x128xf32>
    %cst = arith.constant dense<0.000000e+00> : vector<64x128xf32>
    %2 = tpu.matmul %0, %1, %cst {dimension_numbers = #tpu.dot_dimension_numbers<[1], [0], [0], [1], [0, 0, 1, 1], [], []>} : vector<64x16xf32>, vector<16x128xf32>, vector<64x128xf32> -> vector<64x128xf32>
    %c0_3 = arith.constant 0 : index
    %c0_4 = arith.constant 0 : index
    %3 = vector.load %arg4[%c0_3, %c0_4] : memref<1x128xf32, #tpu.memory_space<vmem>>, vector<1x128xf32>
    %4 = vector.broadcast %3 : vector<1x128xf32> to vector<64x128xf32>
    %5 = arith.addf %2, %4 : vector<64x128xf32>
    %c0_5 = arith.constant 0 : index
    %c0_6 = arith.constant 0 : index
    %6 = vector.load %arg3[%c0_5, %c0_6] : memref<32x128xf32, #tpu.memory_space<vmem>>, vector<32x128xf32>
    %c0_7 = arith.constant 0 : index
    %c0_8 = arith.constant 0 : index
    %7 = vector.load %arg5[%c0_7, %c0_8] : memref<1x32xf32, #tpu.memory_space<vmem>>, vector<1x32xf32>
    %8 = vector.shape_cast %7 : vector<1x32xf32> to vector<1x32xf32>
    %9 = vector.broadcast %8 : vector<1x32xf32> to vector<8x32xf32>
    %cst_9 = arith.constant 0.000000e+00 : f32
    %10 = vector.broadcast %cst_9 : f32 to vector<8x32xf32>
    %11 = vector.extract_strided_slice %5 {offsets = [0, 0], sizes = [8, 128], strides = [1, 1]} : vector<64x128xf32> to vector<8x128xf32>
    %cst_10 = arith.constant dense<0.000000e+00> : vector<8x128xf32>
    %12 = tpu.matmul %10, %6, %cst_10 {dimension_numbers = #tpu.dot_dimension_numbers<[1], [0], [0], [1], [0, 0, 1, 1], [], []>} : vector<8x32xf32>, vector<32x128xf32>, vector<8x128xf32> -> vector<8x128xf32>
    %13 = vector.extract_strided_slice %11 {offsets = [0, 0], sizes = [8, 32], strides = [1, 1]} : vector<8x128xf32> to vector<8x32xf32>
    %14 = vector.extract_strided_slice %11 {offsets = [0, 32], sizes = [8, 32], strides = [1, 1]} : vector<8x128xf32> to vector<8x32xf32>
    %15 = vector.extract_strided_slice %11 {offsets = [0, 64], sizes = [8, 32], strides = [1, 1]} : vector<8x128xf32> to vector<8x32xf32>
    %16 = vector.extract_strided_slice %12 {offsets = [0, 0], sizes = [8, 32], strides = [1, 1]} : vector<8x128xf32> to vector<8x32xf32>
    %17 = vector.extract_strided_slice %12 {offsets = [0, 32], sizes = [8, 32], strides = [1, 1]} : vector<8x128xf32> to vector<8x32xf32>
    %18 = vector.extract_strided_slice %12 {offsets = [0, 64], sizes = [8, 32], strides = [1, 1]} : vector<8x128xf32> to vector<8x32xf32>
    %19 = arith.addf %13, %16 : vector<8x32xf32>
    %20 = arith.negf %19 : vector<8x32xf32>
    %21 = math.exp %20 : vector<8x32xf32>
    %cst_11 = arith.constant 1.000000e+00 : f32
    %22 = vector.broadcast %cst_11 : f32 to vector<8x32xf32>
    %23 = arith.addf %22, %21 : vector<8x32xf32>
    %24 = arith.divf %22, %23 : vector<8x32xf32>
    %25 = arith.addf %14, %17 : vector<8x32xf32>
    %26 = arith.negf %25 : vector<8x32xf32>
    %27 = math.exp %26 : vector<8x32xf32>
    %cst_12 = arith.constant 1.000000e+00 : f32
    %28 = vector.broadcast %cst_12 : f32 to vector<8x32xf32>
    %29 = arith.addf %28, %27 : vector<8x32xf32>
    %30 = arith.divf %28, %29 : vector<8x32xf32>
    %31 = arith.addf %18, %9 : vector<8x32xf32>
    %32 = arith.mulf %24, %31 : vector<8x32xf32>
    %33 = arith.addf %15, %32 : vector<8x32xf32>
    %34 = math.tanh %33 : vector<8x32xf32>
    %cst_13 = arith.constant 1.000000e+00 : f32
    %35 = vector.broadcast %cst_13 : f32 to vector<8x32xf32>
    %36 = arith.subf %35, %30 : vector<8x32xf32>
    %37 = arith.mulf %36, %34 : vector<8x32xf32>
    %38 = arith.mulf %30, %10 : vector<8x32xf32>
    %39 = arith.addf %37, %38 : vector<8x32xf32>
    %40 = vector.extract_strided_slice %5 {offsets = [8, 0], sizes = [8, 128], strides = [1, 1]} : vector<64x128xf32> to vector<8x128xf32>
    %cst_14 = arith.constant dense<0.000000e+00> : vector<8x128xf32>
    %41 = tpu.matmul %39, %6, %cst_14 {dimension_numbers = #tpu.dot_dimension_numbers<[1], [0], [0], [1], [0, 0, 1, 1], [], []>} : vector<8x32xf32>, vector<32x128xf32>, vector<8x128xf32> -> vector<8x128xf32>
    %42 = vector.extract_strided_slice %40 {offsets = [0, 0], sizes = [8, 32], strides = [1, 1]} : vector<8x128xf32> to vector<8x32xf32>
    %43 = vector.extract_strided_slice %40 {offsets = [0, 32], sizes = [8, 32], strides = [1, 1]} : vector<8x128xf32> to vector<8x32xf32>
    %44 = vector.extract_strided_slice %40 {offsets = [0, 64], sizes = [8, 32], strides = [1, 1]} : vector<8x128xf32> to vector<8x32xf32>
    %45 = vector.extract_strided_slice %41 {offsets = [0, 0], sizes = [8, 32], strides = [1, 1]} : vector<8x128xf32> to vector<8x32xf32>
    %46 = vector.extract_strided_slice %41 {offsets = [0, 32], sizes = [8, 32], strides = [1, 1]} : vector<8x128xf32> to vector<8x32xf32>
    %47 = vector.extract_strided_slice %41 {offsets = [0, 64], sizes = [8, 32], strides = [1, 1]} : vector<8x128xf32> to vector<8x32xf32>
    %48 = arith.addf %42, %45 : vector<8x32xf32>
    %49 = arith.negf %48 : vector<8x32xf32>
    %50 = math.exp %49 : vector<8x32xf32>
    %cst_15 = arith.constant 1.000000e+00 : f32
    %51 = vector.broadcast %cst_15 : f32 to vector<8x32xf32>
    %52 = arith.addf %51, %50 : vector<8x32xf32>
    %53 = arith.divf %51, %52 : vector<8x32xf32>
    %54 = arith.addf %43, %46 : vector<8x32xf32>
    %55 = arith.negf %54 : vector<8x32xf32>
    %56 = math.exp %55 : vector<8x32xf32>
    %cst_16 = arith.constant 1.000000e+00 : f32
    %57 = vector.broadcast %cst_16 : f32 to vector<8x32xf32>
    %58 = arith.addf %57, %56 : vector<8x32xf32>
    %59 = arith.divf %57, %58 : vector<8x32xf32>
    %60 = arith.addf %47, %9 : vector<8x32xf32>
    %61 = arith.mulf %53, %60 : vector<8x32xf32>
    %62 = arith.addf %44, %61 : vector<8x32xf32>
    %63 = math.tanh %62 : vector<8x32xf32>
    %cst_17 = arith.constant 1.000000e+00 : f32
    %64 = vector.broadcast %cst_17 : f32 to vector<8x32xf32>
    %65 = arith.subf %64, %59 : vector<8x32xf32>
    %66 = arith.mulf %65, %63 : vector<8x32xf32>
    %67 = arith.mulf %59, %39 : vector<8x32xf32>
    %68 = arith.addf %66, %67 : vector<8x32xf32>
    %69 = vector.extract_strided_slice %5 {offsets = [16, 0], sizes = [8, 128], strides = [1, 1]} : vector<64x128xf32> to vector<8x128xf32>
    %cst_18 = arith.constant dense<0.000000e+00> : vector<8x128xf32>
    %70 = tpu.matmul %68, %6, %cst_18 {dimension_numbers = #tpu.dot_dimension_numbers<[1], [0], [0], [1], [0, 0, 1, 1], [], []>} : vector<8x32xf32>, vector<32x128xf32>, vector<8x128xf32> -> vector<8x128xf32>
    %71 = vector.extract_strided_slice %69 {offsets = [0, 0], sizes = [8, 32], strides = [1, 1]} : vector<8x128xf32> to vector<8x32xf32>
    %72 = vector.extract_strided_slice %69 {offsets = [0, 32], sizes = [8, 32], strides = [1, 1]} : vector<8x128xf32> to vector<8x32xf32>
    %73 = vector.extract_strided_slice %69 {offsets = [0, 64], sizes = [8, 32], strides = [1, 1]} : vector<8x128xf32> to vector<8x32xf32>
    %74 = vector.extract_strided_slice %70 {offsets = [0, 0], sizes = [8, 32], strides = [1, 1]} : vector<8x128xf32> to vector<8x32xf32>
    %75 = vector.extract_strided_slice %70 {offsets = [0, 32], sizes = [8, 32], strides = [1, 1]} : vector<8x128xf32> to vector<8x32xf32>
    %76 = vector.extract_strided_slice %70 {offsets = [0, 64], sizes = [8, 32], strides = [1, 1]} : vector<8x128xf32> to vector<8x32xf32>
    %77 = arith.addf %71, %74 : vector<8x32xf32>
    %78 = arith.negf %77 : vector<8x32xf32>
    %79 = math.exp %78 : vector<8x32xf32>
    %cst_19 = arith.constant 1.000000e+00 : f32
    %80 = vector.broadcast %cst_19 : f32 to vector<8x32xf32>
    %81 = arith.addf %80, %79 : vector<8x32xf32>
    %82 = arith.divf %80, %81 : vector<8x32xf32>
    %83 = arith.addf %72, %75 : vector<8x32xf32>
    %84 = arith.negf %83 : vector<8x32xf32>
    %85 = math.exp %84 : vector<8x32xf32>
    %cst_20 = arith.constant 1.000000e+00 : f32
    %86 = vector.broadcast %cst_20 : f32 to vector<8x32xf32>
    %87 = arith.addf %86, %85 : vector<8x32xf32>
    %88 = arith.divf %86, %87 : vector<8x32xf32>
    %89 = arith.addf %76, %9 : vector<8x32xf32>
    %90 = arith.mulf %82, %89 : vector<8x32xf32>
    %91 = arith.addf %73, %90 : vector<8x32xf32>
    %92 = math.tanh %91 : vector<8x32xf32>
    %cst_21 = arith.constant 1.000000e+00 : f32
    %93 = vector.broadcast %cst_21 : f32 to vector<8x32xf32>
    %94 = arith.subf %93, %88 : vector<8x32xf32>
    %95 = arith.mulf %94, %92 : vector<8x32xf32>
    %96 = arith.mulf %88, %68 : vector<8x32xf32>
    %97 = arith.addf %95, %96 : vector<8x32xf32>
    %98 = vector.extract_strided_slice %5 {offsets = [24, 0], sizes = [8, 128], strides = [1, 1]} : vector<64x128xf32> to vector<8x128xf32>
    %cst_22 = arith.constant dense<0.000000e+00> : vector<8x128xf32>
    %99 = tpu.matmul %97, %6, %cst_22 {dimension_numbers = #tpu.dot_dimension_numbers<[1], [0], [0], [1], [0, 0, 1, 1], [], []>} : vector<8x32xf32>, vector<32x128xf32>, vector<8x128xf32> -> vector<8x128xf32>
    %100 = vector.extract_strided_slice %98 {offsets = [0, 0], sizes = [8, 32], strides = [1, 1]} : vector<8x128xf32> to vector<8x32xf32>
    %101 = vector.extract_strided_slice %98 {offsets = [0, 32], sizes = [8, 32], strides = [1, 1]} : vector<8x128xf32> to vector<8x32xf32>
    %102 = vector.extract_strided_slice %98 {offsets = [0, 64], sizes = [8, 32], strides = [1, 1]} : vector<8x128xf32> to vector<8x32xf32>
    %103 = vector.extract_strided_slice %99 {offsets = [0, 0], sizes = [8, 32], strides = [1, 1]} : vector<8x128xf32> to vector<8x32xf32>
    %104 = vector.extract_strided_slice %99 {offsets = [0, 32], sizes = [8, 32], strides = [1, 1]} : vector<8x128xf32> to vector<8x32xf32>
    %105 = vector.extract_strided_slice %99 {offsets = [0, 64], sizes = [8, 32], strides = [1, 1]} : vector<8x128xf32> to vector<8x32xf32>
    %106 = arith.addf %100, %103 : vector<8x32xf32>
    %107 = arith.negf %106 : vector<8x32xf32>
    %108 = math.exp %107 : vector<8x32xf32>
    %cst_23 = arith.constant 1.000000e+00 : f32
    %109 = vector.broadcast %cst_23 : f32 to vector<8x32xf32>
    %110 = arith.addf %109, %108 : vector<8x32xf32>
    %111 = arith.divf %109, %110 : vector<8x32xf32>
    %112 = arith.addf %101, %104 : vector<8x32xf32>
    %113 = arith.negf %112 : vector<8x32xf32>
    %114 = math.exp %113 : vector<8x32xf32>
    %cst_24 = arith.constant 1.000000e+00 : f32
    %115 = vector.broadcast %cst_24 : f32 to vector<8x32xf32>
    %116 = arith.addf %115, %114 : vector<8x32xf32>
    %117 = arith.divf %115, %116 : vector<8x32xf32>
    %118 = arith.addf %105, %9 : vector<8x32xf32>
    %119 = arith.mulf %111, %118 : vector<8x32xf32>
    %120 = arith.addf %102, %119 : vector<8x32xf32>
    %121 = math.tanh %120 : vector<8x32xf32>
    %cst_25 = arith.constant 1.000000e+00 : f32
    %122 = vector.broadcast %cst_25 : f32 to vector<8x32xf32>
    %123 = arith.subf %122, %117 : vector<8x32xf32>
    %124 = arith.mulf %123, %121 : vector<8x32xf32>
    %125 = arith.mulf %117, %97 : vector<8x32xf32>
    %126 = arith.addf %124, %125 : vector<8x32xf32>
    %127 = vector.extract_strided_slice %5 {offsets = [32, 0], sizes = [8, 128], strides = [1, 1]} : vector<64x128xf32> to vector<8x128xf32>
    %cst_26 = arith.constant dense<0.000000e+00> : vector<8x128xf32>
    %128 = tpu.matmul %126, %6, %cst_26 {dimension_numbers = #tpu.dot_dimension_numbers<[1], [0], [0], [1], [0, 0, 1, 1], [], []>} : vector<8x32xf32>, vector<32x128xf32>, vector<8x128xf32> -> vector<8x128xf32>
    %129 = vector.extract_strided_slice %127 {offsets = [0, 0], sizes = [8, 32], strides = [1, 1]} : vector<8x128xf32> to vector<8x32xf32>
    %130 = vector.extract_strided_slice %127 {offsets = [0, 32], sizes = [8, 32], strides = [1, 1]} : vector<8x128xf32> to vector<8x32xf32>
    %131 = vector.extract_strided_slice %127 {offsets = [0, 64], sizes = [8, 32], strides = [1, 1]} : vector<8x128xf32> to vector<8x32xf32>
    %132 = vector.extract_strided_slice %128 {offsets = [0, 0], sizes = [8, 32], strides = [1, 1]} : vector<8x128xf32> to vector<8x32xf32>
    %133 = vector.extract_strided_slice %128 {offsets = [0, 32], sizes = [8, 32], strides = [1, 1]} : vector<8x128xf32> to vector<8x32xf32>
    %134 = vector.extract_strided_slice %128 {offsets = [0, 64], sizes = [8, 32], strides = [1, 1]} : vector<8x128xf32> to vector<8x32xf32>
    %135 = arith.addf %129, %132 : vector<8x32xf32>
    %136 = arith.negf %135 : vector<8x32xf32>
    %137 = math.exp %136 : vector<8x32xf32>
    %cst_27 = arith.constant 1.000000e+00 : f32
    %138 = vector.broadcast %cst_27 : f32 to vector<8x32xf32>
    %139 = arith.addf %138, %137 : vector<8x32xf32>
    %140 = arith.divf %138, %139 : vector<8x32xf32>
    %141 = arith.addf %130, %133 : vector<8x32xf32>
    %142 = arith.negf %141 : vector<8x32xf32>
    %143 = math.exp %142 : vector<8x32xf32>
    %cst_28 = arith.constant 1.000000e+00 : f32
    %144 = vector.broadcast %cst_28 : f32 to vector<8x32xf32>
    %145 = arith.addf %144, %143 : vector<8x32xf32>
    %146 = arith.divf %144, %145 : vector<8x32xf32>
    %147 = arith.addf %134, %9 : vector<8x32xf32>
    %148 = arith.mulf %140, %147 : vector<8x32xf32>
    %149 = arith.addf %131, %148 : vector<8x32xf32>
    %150 = math.tanh %149 : vector<8x32xf32>
    %cst_29 = arith.constant 1.000000e+00 : f32
    %151 = vector.broadcast %cst_29 : f32 to vector<8x32xf32>
    %152 = arith.subf %151, %146 : vector<8x32xf32>
    %153 = arith.mulf %152, %150 : vector<8x32xf32>
    %154 = arith.mulf %146, %126 : vector<8x32xf32>
    %155 = arith.addf %153, %154 : vector<8x32xf32>
    %156 = vector.extract_strided_slice %5 {offsets = [40, 0], sizes = [8, 128], strides = [1, 1]} : vector<64x128xf32> to vector<8x128xf32>
    %cst_30 = arith.constant dense<0.000000e+00> : vector<8x128xf32>
    %157 = tpu.matmul %155, %6, %cst_30 {dimension_numbers = #tpu.dot_dimension_numbers<[1], [0], [0], [1], [0, 0, 1, 1], [], []>} : vector<8x32xf32>, vector<32x128xf32>, vector<8x128xf32> -> vector<8x128xf32>
    %158 = vector.extract_strided_slice %156 {offsets = [0, 0], sizes = [8, 32], strides = [1, 1]} : vector<8x128xf32> to vector<8x32xf32>
    %159 = vector.extract_strided_slice %156 {offsets = [0, 32], sizes = [8, 32], strides = [1, 1]} : vector<8x128xf32> to vector<8x32xf32>
    %160 = vector.extract_strided_slice %156 {offsets = [0, 64], sizes = [8, 32], strides = [1, 1]} : vector<8x128xf32> to vector<8x32xf32>
    %161 = vector.extract_strided_slice %157 {offsets = [0, 0], sizes = [8, 32], strides = [1, 1]} : vector<8x128xf32> to vector<8x32xf32>
    %162 = vector.extract_strided_slice %157 {offsets = [0, 32], sizes = [8, 32], strides = [1, 1]} : vector<8x128xf32> to vector<8x32xf32>
    %163 = vector.extract_strided_slice %157 {offsets = [0, 64], sizes = [8, 32], strides = [1, 1]} : vector<8x128xf32> to vector<8x32xf32>
    %164 = arith.addf %158, %161 : vector<8x32xf32>
    %165 = arith.negf %164 : vector<8x32xf32>
    %166 = math.exp %165 : vector<8x32xf32>
    %cst_31 = arith.constant 1.000000e+00 : f32
    %167 = vector.broadcast %cst_31 : f32 to vector<8x32xf32>
    %168 = arith.addf %167, %166 : vector<8x32xf32>
    %169 = arith.divf %167, %168 : vector<8x32xf32>
    %170 = arith.addf %159, %162 : vector<8x32xf32>
    %171 = arith.negf %170 : vector<8x32xf32>
    %172 = math.exp %171 : vector<8x32xf32>
    %cst_32 = arith.constant 1.000000e+00 : f32
    %173 = vector.broadcast %cst_32 : f32 to vector<8x32xf32>
    %174 = arith.addf %173, %172 : vector<8x32xf32>
    %175 = arith.divf %173, %174 : vector<8x32xf32>
    %176 = arith.addf %163, %9 : vector<8x32xf32>
    %177 = arith.mulf %169, %176 : vector<8x32xf32>
    %178 = arith.addf %160, %177 : vector<8x32xf32>
    %179 = math.tanh %178 : vector<8x32xf32>
    %cst_33 = arith.constant 1.000000e+00 : f32
    %180 = vector.broadcast %cst_33 : f32 to vector<8x32xf32>
    %181 = arith.subf %180, %175 : vector<8x32xf32>
    %182 = arith.mulf %181, %179 : vector<8x32xf32>
    %183 = arith.mulf %175, %155 : vector<8x32xf32>
    %184 = arith.addf %182, %183 : vector<8x32xf32>
    %185 = vector.extract_strided_slice %5 {offsets = [48, 0], sizes = [8, 128], strides = [1, 1]} : vector<64x128xf32> to vector<8x128xf32>
    %cst_34 = arith.constant dense<0.000000e+00> : vector<8x128xf32>
    %186 = tpu.matmul %184, %6, %cst_34 {dimension_numbers = #tpu.dot_dimension_numbers<[1], [0], [0], [1], [0, 0, 1, 1], [], []>} : vector<8x32xf32>, vector<32x128xf32>, vector<8x128xf32> -> vector<8x128xf32>
    %187 = vector.extract_strided_slice %185 {offsets = [0, 0], sizes = [8, 32], strides = [1, 1]} : vector<8x128xf32> to vector<8x32xf32>
    %188 = vector.extract_strided_slice %185 {offsets = [0, 32], sizes = [8, 32], strides = [1, 1]} : vector<8x128xf32> to vector<8x32xf32>
    %189 = vector.extract_strided_slice %185 {offsets = [0, 64], sizes = [8, 32], strides = [1, 1]} : vector<8x128xf32> to vector<8x32xf32>
    %190 = vector.extract_strided_slice %186 {offsets = [0, 0], sizes = [8, 32], strides = [1, 1]} : vector<8x128xf32> to vector<8x32xf32>
    %191 = vector.extract_strided_slice %186 {offsets = [0, 32], sizes = [8, 32], strides = [1, 1]} : vector<8x128xf32> to vector<8x32xf32>
    %192 = vector.extract_strided_slice %186 {offsets = [0, 64], sizes = [8, 32], strides = [1, 1]} : vector<8x128xf32> to vector<8x32xf32>
    %193 = arith.addf %187, %190 : vector<8x32xf32>
    %194 = arith.negf %193 : vector<8x32xf32>
    %195 = math.exp %194 : vector<8x32xf32>
    %cst_35 = arith.constant 1.000000e+00 : f32
    %196 = vector.broadcast %cst_35 : f32 to vector<8x32xf32>
    %197 = arith.addf %196, %195 : vector<8x32xf32>
    %198 = arith.divf %196, %197 : vector<8x32xf32>
    %199 = arith.addf %188, %191 : vector<8x32xf32>
    %200 = arith.negf %199 : vector<8x32xf32>
    %201 = math.exp %200 : vector<8x32xf32>
    %cst_36 = arith.constant 1.000000e+00 : f32
    %202 = vector.broadcast %cst_36 : f32 to vector<8x32xf32>
    %203 = arith.addf %202, %201 : vector<8x32xf32>
    %204 = arith.divf %202, %203 : vector<8x32xf32>
    %205 = arith.addf %192, %9 : vector<8x32xf32>
    %206 = arith.mulf %198, %205 : vector<8x32xf32>
    %207 = arith.addf %189, %206 : vector<8x32xf32>
    %208 = math.tanh %207 : vector<8x32xf32>
    %cst_37 = arith.constant 1.000000e+00 : f32
    %209 = vector.broadcast %cst_37 : f32 to vector<8x32xf32>
    %210 = arith.subf %209, %204 : vector<8x32xf32>
    %211 = arith.mulf %210, %208 : vector<8x32xf32>
    %212 = arith.mulf %204, %184 : vector<8x32xf32>
    %213 = arith.addf %211, %212 : vector<8x32xf32>
    %214 = vector.extract_strided_slice %5 {offsets = [56, 0], sizes = [8, 128], strides = [1, 1]} : vector<64x128xf32> to vector<8x128xf32>
    %cst_38 = arith.constant dense<0.000000e+00> : vector<8x128xf32>
    %215 = tpu.matmul %213, %6, %cst_38 {dimension_numbers = #tpu.dot_dimension_numbers<[1], [0], [0], [1], [0, 0, 1, 1], [], []>} : vector<8x32xf32>, vector<32x128xf32>, vector<8x128xf32> -> vector<8x128xf32>
    %216 = vector.extract_strided_slice %214 {offsets = [0, 0], sizes = [8, 32], strides = [1, 1]} : vector<8x128xf32> to vector<8x32xf32>
    %217 = vector.extract_strided_slice %214 {offsets = [0, 32], sizes = [8, 32], strides = [1, 1]} : vector<8x128xf32> to vector<8x32xf32>
    %218 = vector.extract_strided_slice %214 {offsets = [0, 64], sizes = [8, 32], strides = [1, 1]} : vector<8x128xf32> to vector<8x32xf32>
    %219 = vector.extract_strided_slice %215 {offsets = [0, 0], sizes = [8, 32], strides = [1, 1]} : vector<8x128xf32> to vector<8x32xf32>
    %220 = vector.extract_strided_slice %215 {offsets = [0, 32], sizes = [8, 32], strides = [1, 1]} : vector<8x128xf32> to vector<8x32xf32>
    %221 = vector.extract_strided_slice %215 {offsets = [0, 64], sizes = [8, 32], strides = [1, 1]} : vector<8x128xf32> to vector<8x32xf32>
    %222 = arith.addf %216, %219 : vector<8x32xf32>
    %223 = arith.negf %222 : vector<8x32xf32>
    %224 = math.exp %223 : vector<8x32xf32>
    %cst_39 = arith.constant 1.000000e+00 : f32
    %225 = vector.broadcast %cst_39 : f32 to vector<8x32xf32>
    %226 = arith.addf %225, %224 : vector<8x32xf32>
    %227 = arith.divf %225, %226 : vector<8x32xf32>
    %228 = arith.addf %217, %220 : vector<8x32xf32>
    %229 = arith.negf %228 : vector<8x32xf32>
    %230 = math.exp %229 : vector<8x32xf32>
    %cst_40 = arith.constant 1.000000e+00 : f32
    %231 = vector.broadcast %cst_40 : f32 to vector<8x32xf32>
    %232 = arith.addf %231, %230 : vector<8x32xf32>
    %233 = arith.divf %231, %232 : vector<8x32xf32>
    %234 = arith.addf %221, %9 : vector<8x32xf32>
    %235 = arith.mulf %227, %234 : vector<8x32xf32>
    %236 = arith.addf %218, %235 : vector<8x32xf32>
    %237 = math.tanh %236 : vector<8x32xf32>
    %cst_41 = arith.constant 1.000000e+00 : f32
    %238 = vector.broadcast %cst_41 : f32 to vector<8x32xf32>
    %239 = arith.subf %238, %233 : vector<8x32xf32>
    %240 = arith.mulf %239, %237 : vector<8x32xf32>
    %241 = arith.mulf %233, %213 : vector<8x32xf32>
    %242 = arith.addf %240, %241 : vector<8x32xf32>
    %c0_42 = arith.constant 0 : index
    %c0_43 = arith.constant 0 : index
    %243 = vector.load %arg6[%c0_42, %c0_43] : memref<32x128xf32, #tpu.memory_space<vmem>>, vector<32x128xf32>
    %cst_44 = arith.constant dense<0.000000e+00> : vector<8x128xf32>
    %244 = tpu.matmul %242, %243, %cst_44 {dimension_numbers = #tpu.dot_dimension_numbers<[1], [0], [0], [1], [0, 0, 1, 1], [], []>} : vector<8x32xf32>, vector<32x128xf32>, vector<8x128xf32> -> vector<8x128xf32>
    %c0_45 = arith.constant 0 : index
    %c0_46 = arith.constant 0 : index
    %245 = vector.load %arg7[%c0_45, %c0_46] : memref<1x128xf32, #tpu.memory_space<vmem>>, vector<1x128xf32>
    %246 = vector.broadcast %245 : vector<1x128xf32> to vector<8x128xf32>
    %247 = arith.addf %244, %246 : vector<8x128xf32>
    %c0_47 = arith.constant 0 : index
    %c0_48 = arith.constant 0 : index
    %248 = vector.load %arg8[%c0_47, %c0_48] : memref<8x128xf32, #tpu.memory_space<vmem>>, vector<8x128xf32>
    tpu.vector_store %arg8[%c0_47, %c0_48], %247 {strides = array<i32>} : memref<8x128xf32, #tpu.memory_space<vmem>>, vector<8x128xf32>,
    return
  }
  func.func @transform_0(%arg0: i32) -> (i32, i32) {
    %c0_i32 = arith.constant 0 : i32
    %c0_i32_0 = arith.constant 0 : i32
    %c0_i32_1 = arith.constant 0 : i32
    return %c0_i32, %c0_i32_0 : i32, i32
  }
  func.func @transform_1(%arg0: i32) -> (i32, i32) {
    %c0_i32 = arith.constant 0 : i32
    %c0_i32_0 = arith.constant 0 : i32
    %c0_i32_1 = arith.constant 0 : i32
    return %c0_i32, %c0_i32_0 : i32, i32
  }
  func.func @transform_2(%arg0: i32) -> (i32, i32) {
    %c0_i32 = arith.constant 0 : i32
    %c0_i32_0 = arith.constant 0 : i32
    %c0_i32_1 = arith.constant 0 : i32
    return %c0_i32, %c0_i32_0 : i32, i32
  }
  func.func @transform_3(%arg0: i32) -> (i32, i32) {
    %c0_i32 = arith.constant 0 : i32
    %c0_i32_0 = arith.constant 0 : i32
    %c0_i32_1 = arith.constant 0 : i32
    return %c0_i32, %c0_i32_0 : i32, i32
  }
  func.func @transform_4(%arg0: i32) -> (i32, i32) {
    %c0_i32 = arith.constant 0 : i32
    %c0_i32_0 = arith.constant 0 : i32
    %c0_i32_1 = arith.constant 0 : i32
    return %c0_i32, %c0_i32_0 : i32, i32
  }
  func.func @transform_5(%arg0: i32) -> (i32, i32) {
    %c0_i32 = arith.constant 0 : i32
    %c0_i32_0 = arith.constant 0 : i32
    %c0_i32_1 = arith.constant 0 : i32
    return %c0_i32, %c0_i32_0 : i32, i32
  }
  func.func @transform_6(%arg0: i32) -> (i32, i32) {
    %c0_i32 = arith.constant 0 : i32
    %c0_i32_0 = arith.constant 0 : i32
    %c0_i32_1 = arith.constant 0 : i32
    return %c0_i32, %c0_i32_0 : i32, i32
  }
  func.func @transform_7(%arg0: i32) -> (i32, i32) {
    %c0_i32 = arith.constant 0 : i32
    %c0_i32_0 = arith.constant 0 : i32
    %c0_i32_1 = arith.constant 0 : i32
    return %c0_i32, %c0_i32_0 : i32, i32
  }
}

</mosaic_0001>

<llo_original>
// kernel: gru_fc_forward.1
$region0: #{gru_fc_forward.1}
  #allocation0 [shape = 'u32[]', space=smem, size = 0x4, offset = 0x4, fixed_abs, tag = 'smem constant byte address 0x4 - core index']
  #allocation1 [shape = 'u32[72,128]{1,0:T(1,128)}', space=vmem, size = 0x9000, scoped, tag = 'internal scratch']
  %s0 = inlined_call_operand.vmem [shape: f32[64,16], index: 0, kind: input, shape index: {}]
  %s1 = inlined_call_operand.vmem [shape: f32[16,128], index: 1, kind: input, shape index: {}]
  %s2 = inlined_call_operand.vmem [shape: f32[32,128], index: 2, kind: input, shape index: {}]
  %s3 = inlined_call_operand.vmem [shape: f32[1,128], index: 3, kind: input, shape index: {}]
  %s4 = inlined_call_operand.vmem [shape: f32[1,32], index: 4, kind: input, shape index: {}]
  %s5 = inlined_call_operand.vmem [shape: f32[32,128], index: 5, kind: input, shape index: {}]
  %s6 = inlined_call_operand.vmem [shape: f32[1,128], index: 6, kind: input, shape index: {}]
  %s7 = inlined_call_operand.vmem [shape: f32[8,128], index: 7, kind: output, shape index: {}]
  %s8 = sld [smem:[#allocation0]]
  $region38: #{gru_fc_forward.1} parent=0
    _
  %s10 = ssub.s32 1, %s8
  %s11 = scalar_select 0, %s10, %s8
  // Predicated region
  $region2: #{gru_fc_forward.1} parent=0 // pred_check
    _
  $region3: #{gru_fc_forward.1} parent=0 // pred_check_branch
    %13 = sbr.rel (0) target = $region5
  $region4: #{gru_fc_forward.1} parent=0 // pred_region
    _
  $region5: #{gru_fc_forward.1} parent=0 // pred_fallthru
    _
  // Predicated region
  $region6: #{gru_fc_forward.1} parent=0 // pred_check
    _
  $region7: #{gru_fc_forward.1} parent=0 // pred_check_branch
    %15 = sbr.rel (0) target = $region9
  $region8: #{gru_fc_forward.1} parent=0 // pred_region
    _
  $region9: #{gru_fc_forward.1} parent=0 // pred_fallthru
    _
  // Predicated region
  $region10: #{gru_fc_forward.1} parent=0 // pred_check
    _
  $region11: #{gru_fc_forward.1} parent=0 // pred_check_branch
    %17 = sbr.rel (0) target = $region13
  $region12: #{gru_fc_forward.1} parent=0 // pred_region
    _
  $region13: #{gru_fc_forward.1} parent=0 // pred_fallthru
    _
  // Predicated region
  $region14: #{gru_fc_forward.1} parent=0 // pred_check
    _
  $region15: #{gru_fc_forward.1} parent=0 // pred_check_branch
    %19 = sbr.rel (0) target = $region17
  $region16: #{gru_fc_forward.1} parent=0 // pred_region
    _
  $region17: #{gru_fc_forward.1} parent=0 // pred_fallthru
    _
  // Predicated region
  $region18: #{gru_fc_forward.1} parent=0 // pred_check
    _
  $region19: #{gru_fc_forward.1} parent=0 // pred_check_branch
    %21 = sbr.rel (0) target = $region21
  $region20: #{gru_fc_forward.1} parent=0 // pred_region
    _
  $region21: #{gru_fc_forward.1} parent=0 // pred_fallthru
    _
  // Predicated region
  $region22: #{gru_fc_forward.1} parent=0 // pred_check
    _
  $region23: #{gru_fc_forward.1} parent=0 // pred_check_branch
    %23 = sbr.rel (0) target = $region25
  $region24: #{gru_fc_forward.1} parent=0 // pred_region
    _
  $region25: #{gru_fc_forward.1} parent=0 // pred_fallthru
    _
  // Predicated region
  $region26: #{gru_fc_forward.1} parent=0 // pred_check
    _
  $region27: #{gru_fc_forward.1} parent=0 // pred_check_branch
    %25 = sbr.rel (0) target = $region29
  $region28: #{gru_fc_forward.1} parent=0 // pred_region
    _
  $region29: #{gru_fc_forward.1} parent=0 // pred_fallthru
    _
  %v26 = vld [vmem:[%s0] sm:$0xff]
  %v27 = vld [vmem:[%s0 + $0x8] sm:$0xff]
  %v28 = vld [vmem:[%s0 + $0x10] sm:$0xff]
  %v29 = vld [vmem:[%s0 + $0x18] sm:$0xff]
  %v30 = vld [vmem:[%s0 + $0x20] sm:$0xff]
  %v31 = vld [vmem:[%s0 + $0x28] sm:$0xff]
  %v32 = vld [vmem:[%s0 + $0x30] sm:$0xff]
  %v33 = vld [vmem:[%s0 + $0x38] sm:$0xff]
  %v34 = vld [vmem:[%s1] sm:$0xff]
  %v35 = vld [vmem:[%s1 + $0x8] sm:$0xff]
  %v36 = vld [vmem:[%s3] sm:$0x1]
  %v38 = vperm.slane %v36, 0
  %vm40 = vcmask 130048
  %v42 = vsel %vm40, %v26, 0
  %v45 = vsel %vm40, %v27, 0
  %v48 = vsel %vm40, %v28, 0
  %v51 = vsel %vm40, %v29, 0
  %v54 = vsel %vm40, %v30, 0
  %v57 = vsel %vm40, %v31, 0
  %v60 = vsel %vm40, %v32, 0
  %v63 = vsel %vm40, %v33, 0
  %65 = vmatpush.msra.mxu0 0.0
  %66 = vmatpush.msra.mxu0 0.0
  %67 = vmatpush.msra.mxu0 0.0
  %68 = vmatpush.msra.mxu0 0.0
  %69 = vmatpush.msra.mxu0 0.0
  %70 = vmatpush.msra.mxu0 0.0
  %71 = vmatpush.msra.mxu0 0.0
  %72 = vmatpush.msra.mxu0 0.0
  %73 = vmatpush.msra.mxu0 0.0
  %74 = vmatpush.msra.mxu0 0.0
  %75 = vmatpush.msra.mxu0 0.0
  %76 = vmatpush.msra.mxu0 0.0
  %77 = vmatpush.msra.mxu0 0.0
  %78 = vmatpush.msra.mxu0 0.0
  %79 = vmatpush.msra.mxu0 %v35
  %80 = vmatpush.msra.mxu0 %v34
  %81 = vmatmul.f32.gmra.mxu0 %v42
  %v82 = vpop.f32.mrf.mxu0
  %v83 = vadd.f32 %v38, %v82
  %84 = vmatmul.f32.gmra.mxu0 %v45
  %v85 = vpop.f32.mrf.mxu0
  %v86 = vadd.f32 %v38, %v85
  %87 = vmatmul.f32.gmra.mxu0 %v48
  %v88 = vpop.f32.mrf.mxu0
  %v89 = vadd.f32 %v38, %v88
  %90 = vmatmul.f32.gmra.mxu0 %v51
  %v91 = vpop.f32.mrf.mxu0
  %v92 = vadd.f32 %v38, %v91
  %93 = vmatmul.f32.gmra.mxu0 %v54
  %v94 = vpop.f32.mrf.mxu0
  %v95 = vadd.f32 %v38, %v94
  %96 = vmatmul.f32.gmra.mxu0 %v57
  %v97 = vpop.f32.mrf.mxu0
  %v98 = vadd.f32 %v38, %v97
  %99 = vmatmul.f32.gmra.mxu0 %v60
  %v100 = vpop.f32.mrf.mxu0
  %v101 = vadd.f32 %v38, %v100
  %102 = vmatmul.f32.gmra.mxu0 %v63
  %v103 = vpop.f32.mrf.mxu0
  %v104 = vadd.f32 %v38, %v103
  %105 = vdwg.mxu0
  %v106 = vld [vmem:[%s2] sm:$0xff]
  %v107 = vld [vmem:[%s2 + $0x8] sm:$0xff]
  %v108 = vld [vmem:[%s2 + $0x10] sm:$0xff]
  %v109 = vld [vmem:[%s2 + $0x18] sm:$0xff]
  %v110 = vld [vmem:[%s4] sm:$0x1]
  %v112 = vperm.slane %v110, 0
  %vm113 = vcmask 261120
  %v115 = vsel %vm113, 0.0, 0
  %117 = vmatpush.msra.mxu0 0.0
  %118 = vmatpush.msra.mxu0 0.0
  %119 = vmatpush.msra.mxu0 0.0
  %120 = vmatpush.msra.mxu0 0.0
  %121 = vmatpush.msra.mxu0 0.0
  %122 = vmatpush.msra.mxu0 0.0
  %123 = vmatpush.msra.mxu0 0.0
  %124 = vmatpush.msra.mxu0 0.0
  %125 = vmatpush.msra.mxu0 0.0
  %126 = vmatpush.msra.mxu0 0.0
  %127 = vmatpush.msra.mxu0 0.0
  %128 = vmatpush.msra.mxu0 0.0
  %129 = vmatpush.msra.mxu0 %v109
  %130 = vmatpush.msra.mxu0 %v108
  %131 = vmatpush.msra.mxu0 %v107
  %132 = vmatpush.msra.mxu0 %v106
  %133 = vmatmul.f32.gmra.mxu0 %v115
  %v134 = vpop.f32.mrf.mxu0
  %v135 = vadd.f32 0.0, %v134
  %136 = vdwg.mxu0
  %v137 = vadd.f32 %v83, %v135
  %v138 = vxor.u32 %v137, 2147483648
  %v139 = vmul.f32 %v138, 1.442695
  %v140 = vpow.pop %v139
  %v141 = vadd.f32 %v140, 1.0
  %v142 = vrcp.pop %v141
  %v143 = vmul.f32 %v141, %v142
  %v144 = vsub.f32 1.0, %v143
  %v145 = vmul.f32 %v142, %v144
  %v146 = vadd.f32 %v142, %v145
  %vm147 = vweird.f32 %v141
  %vm148 = vweird.f32 %v142
  %vm149 = vmor %vm147, %vm148
  %v150 = vsel %vm149, %v142, %v146
  %v151 = vand.u32 2147483647, %v141
  %vm152 = vcmp.eq.f32.partialorder %v151, 8.507059e+37
  %v153 = vand.u32 %v141, 2147483648
  %v154 = vor.u32 1.1754944e-38, %v153
  %v155 = vsel %vm152, %v154, %v150
  %v156 = vmul.f32 1.0, %v155
  %157 = vrot.lane.b32.xlu0 %v112, 64
  %v158 = vpop.permute.xlu0 %157
  %v160 = vadd.f32 %v135, %v158
  %162 = vrot.lane.b32.xlu0 %v160, 64
  %v163 = vpop.permute.xlu0 %162
  %v165 = vmul.f32 %v156, %v163
  %167 = vrot.lane.b32.xlu0 %v165, 64
  %v168 = vpop.permute.xlu0 %167
  %v170 = vadd.f32 %v83, %v168
  %v171 = vtanh.pop %v170
  %v172 = vsub.f32 1.0, %v156
  %174 = vrot.lane.b32.xlu0 %v171, 96
  %v175 = vpop.permute.xlu0 %174
  %v177 = vmul.f32 %v172, %v175
  %v178 = vmul.f32 %v156, 0.0
  %v179 = vadd.f32 %v177, %v178
  %181 = vrot.lane.b32.xlu0 %v179, 96
  %v182 = vpop.permute.xlu0 %181
  %v183 = vsel %vm113, %v182, 0
  %185 = vmatpush.msra.mxu0 0.0
  %186 = vmatpush.msra.mxu0 0.0
  %187 = vmatpush.msra.mxu0 0.0
  %188 = vmatpush.msra.mxu0 0.0
  %189 = vmatpush.msra.mxu0 0.0
  %190 = vmatpush.msra.mxu0 0.0
  %191 = vmatpush.msra.mxu0 0.0
  %192 = vmatpush.msra.mxu0 0.0
  %193 = vmatpush.msra.mxu0 0.0
  %194 = vmatpush.msra.mxu0 0.0
  %195 = vmatpush.msra.mxu0 0.0
  %196 = vmatpush.msra.mxu0 0.0
  %197 = vmatpush.msra.mxu0 %v109
  %198 = vmatpush.msra.mxu0 %v108
  %199 = vmatpush.msra.mxu0 %v107
  %200 = vmatpush.msra.mxu0 %v106
  %201 = vmatmul.f32.gmra.mxu0 %v183
  %v202 = vpop.f32.mrf.mxu0
  %v203 = vadd.f32 0.0, %v202
  %204 = vdwg.mxu0
  %v205 = vadd.f32 %v86, %v203
  %v206 = vxor.u32 %v205, 2147483648
  %v207 = vmul.f32 %v206, 1.442695
  %v208 = vpow.pop %v207
  %v209 = vadd.f32 %v208, 1.0
  %v210 = vrcp.pop %v209
  %v211 = vmul.f32 %v209, %v210
  %v212 = vsub.f32 1.0, %v211
  %v213 = vmul.f32 %v210, %v212
  %v214 = vadd.f32 %v210, %v213
  %vm215 = vweird.f32 %v209
  %vm216 = vweird.f32 %v210
  %vm217 = vmor %vm215, %vm216
  %v218 = vsel %vm217, %v210, %v214
  %v219 = vand.u32 2147483647, %v209
  %vm220 = vcmp.eq.f32.partialorder %v219, 8.507059e+37
  %v221 = vand.u32 %v209, 2147483648
  %v222 = vor.u32 1.1754944e-38, %v221
  %v223 = vsel %vm220, %v222, %v218
  %v224 = vmul.f32 1.0, %v223
  %v225 = vadd.f32 %v203, %v158
  %227 = vrot.lane.b32.xlu0 %v225, 64
  %v228 = vpop.permute.xlu0 %227
  %v230 = vmul.f32 %v224, %v228
  %232 = vrot.lane.b32.xlu0 %v230, 64
  %v233 = vpop.permute.xlu0 %232
  %v235 = vadd.f32 %v86, %v233
  %v236 = vtanh.pop %v235
  %v237 = vsub.f32 1.0, %v224
  %239 = vrot.lane.b32.xlu0 %v236, 96
  %v240 = vpop.permute.xlu0 %239
  %v242 = vmul.f32 %v237, %v240
  %v243 = vmul.f32 %v224, %v179
  %v244 = vadd.f32 %v242, %v243
  %246 = vrot.lane.b32.xlu0 %v244, 96
  %v247 = vpop.permute.xlu0 %246
  %v248 = vsel %vm113, %v247, 0
  %250 = vmatpush.msra.mxu0 0.0
  %251 = vmatpush.msra.mxu0 0.0
  %252 = vmatpush.msra.mxu0 0.0
  %253 = vmatpush.msra.mxu0 0.0
  %254 = vmatpush.msra.mxu0 0.0
  %255 = vmatpush.msra.mxu0 0.0
  %256 = vmatpush.msra.mxu0 0.0
  %257 = vmatpush.msra.mxu0 0.0
  %258 = vmatpush.msra.mxu0 0.0
  %259 = vmatpush.msra.mxu0 0.0
  %260 = vmatpush.msra.mxu0 0.0
  %261 = vmatpush.msra.mxu0 0.0
  %262 = vmatpush.msra.mxu0 %v109
  %263 = vmatpush.msra.mxu0 %v108
  %264 = vmatpush.msra.mxu0 %v107
  %265 = vmatpush.msra.mxu0 %v106
  %266 = vmatmul.f32.gmra.mxu0 %v248
  %v267 = vpop.f32.mrf.mxu0
  %v268 = vadd.f32 0.0, %v267
  %269 = vdwg.mxu0
  %v270 = vadd.f32 %v89, %v268
  %v271 = vxor.u32 %v270, 2147483648
  %v272 = vmul.f32 %v271, 1.442695
  %v273 = vpow.pop %v272
  %v274 = vadd.f32 %v273, 1.0
  %v275 = vrcp.pop %v274
  %v276 = vmul.f32 %v274, %v275
  %v277 = vsub.f32 1.0, %v276
  %v278 = vmul.f32 %v275, %v277
  %v279 = vadd.f32 %v275, %v278
  %vm280 = vweird.f32 %v274
  %vm281 = vweird.f32 %v275
  %vm282 = vmor %vm280, %vm281
  %v283 = vsel %vm282, %v275, %v279
  %v284 = vand.u32 2147483647, %v274
  %vm285 = vcmp.eq.f32.partialorder %v284, 8.507059e+37
  %v286 = vand.u32 %v274, 2147483648
  %v287 = vor.u32 1.1754944e-38, %v286
  %v288 = vsel %vm285, %v287, %v283
  %v289 = vmul.f32 1.0, %v288
  %v290 = vadd.f32 %v268, %v158
  %292 = vrot.lane.b32.xlu0 %v290, 64
  %v293 = vpop.permute.xlu0 %292
  %v295 = vmul.f32 %v289, %v293
  %297 = vrot.lane.b32.xlu0 %v295, 64
  %v298 = vpop.permute.xlu0 %297
  %v300 = vadd.f32 %v89, %v298
  %v301 = vtanh.pop %v300
  %v302 = vsub.f32 1.0, %v289
  %304 = vrot.lane.b32.xlu0 %v301, 96
  %v305 = vpop.permute.xlu0 %304
  %v307 = vmul.f32 %v302, %v305
  %v308 = vmul.f32 %v289, %v244
  %v309 = vadd.f32 %v307, %v308
  %311 = vrot.lane.b32.xlu0 %v309, 96
  %v312 = vpop.permute.xlu0 %311
  %v313 = vsel %vm113, %v312, 0
  %315 = vmatpush.msra.mxu0 0.0
  %316 = vmatpush.msra.mxu0 0.0
  %317 = vmatpush.msra.mxu0 0.0
  %318 = vmatpush.msra.mxu0 0.0
  %319 = vmatpush.msra.mxu0 0.0
  %320 = vmatpush.msra.mxu0 0.0
  %321 = vmatpush.msra.mxu0 0.0
  %322 = vmatpush.msra.mxu0 0.0
  %323 = vmatpush.msra.mxu0 0.0
  %324 = vmatpush.msra.mxu0 0.0
  %325 = vmatpush.msra.mxu0 0.0
  %326 = vmatpush.msra.mxu0 0.0
  %327 = vmatpush.msra.mxu0 %v109
  %328 = vmatpush.msra.mxu0 %v108
  %329 = vmatpush.msra.mxu0 %v107
  %330 = vmatpush.msra.mxu0 %v106
  %331 = vmatmul.f32.gmra.mxu0 %v313
  %v332 = vpop.f32.mrf.mxu0
  %v333 = vadd.f32 0.0, %v332
  %334 = vdwg.mxu0
  %v335 = vadd.f32 %v92, %v333
  %v336 = vxor.u32 %v335, 2147483648
  %v337 = vmul.f32 %v336, 1.442695
  %v338 = vpow.pop %v337
  %v339 = vadd.f32 %v338, 1.0
  %v340 = vrcp.pop %v339
  %v341 = vmul.f32 %v339, %v340
  %v342 = vsub.f32 1.0, %v341
  %v343 = vmul.f32 %v340, %v342
  %v344 = vadd.f32 %v340, %v343
  %vm345 = vweird.f32 %v339
  %vm346 = vweird.f32 %v340
  %vm347 = vmor %vm345, %vm346
  %v348 = vsel %vm347, %v340, %v344
  %v349 = vand.u32 2147483647, %v339
  %vm350 = vcmp.eq.f32.partialorder %v349, 8.507059e+37
  %v351 = vand.u32 %v339, 2147483648
  %v352 = vor.u32 1.1754944e-38, %v351
  %v353 = vsel %vm350, %v352, %v348
  %v354 = vmul.f32 1.0, %v353
  %v355 = vadd.f32 %v333, %v158
  %357 = vrot.lane.b32.xlu0 %v355, 64
  %v358 = vpop.permute.xlu0 %357
  %v360 = vmul.f32 %v354, %v358
  %362 = vrot.lane.b32.xlu0 %v360, 64
  %v363 = vpop.permute.xlu0 %362
  %v365 = vadd.f32 %v92, %v363
  %v366 = vtanh.pop %v365
  %v367 = vsub.f32 1.0, %v354
  %369 = vrot.lane.b32.xlu0 %v366, 96
  %v370 = vpop.permute.xlu0 %369
  %v372 = vmul.f32 %v367, %v370
  %v373 = vmul.f32 %v354, %v309
  %v374 = vadd.f32 %v372, %v373
  %376 = vrot.lane.b32.xlu0 %v374, 96
  %v377 = vpop.permute.xlu0 %376
  %v378 = vsel %vm113, %v377, 0
  %380 = vmatpush.msra.mxu0 0.0
  %381 = vmatpush.msra.mxu0 0.0
  %382 = vmatpush.msra.mxu0 0.0
  %383 = vmatpush.msra.mxu0 0.0
  %384 = vmatpush.msra.mxu0 0.0
  %385 = vmatpush.msra.mxu0 0.0
  %386 = vmatpush.msra.mxu0 0.0
  %387 = vmatpush.msra.mxu0 0.0
  %388 = vmatpush.msra.mxu0 0.0
  %389 = vmatpush.msra.mxu0 0.0
  %390 = vmatpush.msra.mxu0 0.0
  %391 = vmatpush.msra.mxu0 0.0
  %392 = vmatpush.msra.mxu0 %v109
  %393 = vmatpush.msra.mxu0 %v108
  %394 = vmatpush.msra.mxu0 %v107
  %395 = vmatpush.msra.mxu0 %v106
  %396 = vmatmul.f32.gmra.mxu0 %v378
  %v397 = vpop.f32.mrf.mxu0
  %v398 = vadd.f32 0.0, %v397
  %399 = vdwg.mxu0
  %v400 = vadd.f32 %v95, %v398
  %v401 = vxor.u32 %v400, 2147483648
  %v402 = vmul.f32 %v401, 1.442695
  %v403 = vpow.pop %v402
  %v404 = vadd.f32 %v403, 1.0
  %v405 = vrcp.pop %v404
  %v406 = vmul.f32 %v404, %v405
  %v407 = vsub.f32 1.0, %v406
  %v408 = vmul.f32 %v405, %v407
  %v409 = vadd.f32 %v405, %v408
  %vm410 = vweird.f32 %v404
  %vm411 = vweird.f32 %v405
  %vm412 = vmor %vm410, %vm411
  %v413 = vsel %vm412, %v405, %v409
  %v414 = vand.u32 2147483647, %v404
  %vm415 = vcmp.eq.f32.partialorder %v414, 8.507059e+37
  %v416 = vand.u32 %v404, 2147483648
  %v417 = vor.u32 1.1754944e-38, %v416
  %v418 = vsel %vm415, %v417, %v413
  %v419 = vmul.f32 1.0, %v418
  %v420 = vadd.f32 %v398, %v158
  %422 = vrot.lane.b32.xlu0 %v420, 64
  %v423 = vpop.permute.xlu0 %422
  %v425 = vmul.f32 %v419, %v423
  %427 = vrot.lane.b32.xlu0 %v425, 64
  %v428 = vpop.permute.xlu0 %427
  %v430 = vadd.f32 %v95, %v428
  %v431 = vtanh.pop %v430
  %v432 = vsub.f32 1.0, %v419
  %434 = vrot.lane.b32.xlu0 %v431, 96
  %v435 = vpop.permute.xlu0 %434
  %v437 = vmul.f32 %v432, %v435
  %v438 = vmul.f32 %v419, %v374
  %v439 = vadd.f32 %v437, %v438
  %441 = vrot.lane.b32.xlu0 %v439, 96
  %v442 = vpop.permute.xlu0 %441
  %v443 = vsel %vm113, %v442, 0
  %445 = vmatpush.msra.mxu0 0.0
  %446 = vmatpush.msra.mxu0 0.0
  %447 = vmatpush.msra.mxu0 0.0
  %448 = vmatpush.msra.mxu0 0.0
  %449 = vmatpush.msra.mxu0 0.0
  %450 = vmatpush.msra.mxu0 0.0
  %451 = vmatpush.msra.mxu0 0.0
  %452 = vmatpush.msra.mxu0 0.0
  %453 = vmatpush.msra.mxu0 0.0
  %454 = vmatpush.msra.mxu0 0.0
  %455 = vmatpush.msra.mxu0 0.0
  %456 = vmatpush.msra.mxu0 0.0
  %457 = vmatpush.msra.mxu0 %v109
  %458 = vmatpush.msra.mxu0 %v108
  %459 = vmatpush.msra.mxu0 %v107
  %460 = vmatpush.msra.mxu0 %v106
  %461 = vmatmul.f32.gmra.mxu0 %v443
  %v462 = vpop.f32.mrf.mxu0
  %v463 = vadd.f32 0.0, %v462
  %464 = vdwg.mxu0
  %v465 = vadd.f32 %v98, %v463
  %v466 = vxor.u32 %v465, 2147483648
  %v467 = vmul.f32 %v466, 1.442695
  %v468 = vpow.pop %v467
  %v469 = vadd.f32 %v468, 1.0
  %v470 = vrcp.pop %v469
  %v471 = vmul.f32 %v469, %v470
  %v472 = vsub.f32 1.0, %v471
  %v473 = vmul.f32 %v470, %v472
  %v474 = vadd.f32 %v470, %v473
  %vm475 = vweird.f32 %v469
  %vm476 = vweird.f32 %v470
  %vm477 = vmor %vm475, %vm476
  %v478 = vsel %vm477, %v470, %v474
  %v479 = vand.u32 2147483647, %v469
  %vm480 = vcmp.eq.f32.partialorder %v479, 8.507059e+37
  %v481 = vand.u32 %v469, 2147483648
  %v482 = vor.u32 1.1754944e-38, %v481
  %v483 = vsel %vm480, %v482, %v478
  %v484 = vmul.f32 1.0, %v483
  %v485 = vadd.f32 %v463, %v158
  %487 = vrot.lane.b32.xlu0 %v485, 64
  %v488 = vpop.permute.xlu0 %487
  %v490 = vmul.f32 %v484, %v488
  %492 = vrot.lane.b32.xlu0 %v490, 64
  %v493 = vpop.permute.xlu0 %492
  %v495 = vadd.f32 %v98, %v493
  %v496 = vtanh.pop %v495
  %v497 = vsub.f32 1.0, %v484
  %499 = vrot.lane.b32.xlu0 %v496, 96
  %v500 = vpop.permute.xlu0 %499
  %v502 = vmul.f32 %v497, %v500
  %v503 = vmul.f32 %v484, %v439
  %v504 = vadd.f32 %v502, %v503
  %506 = vrot.lane.b32.xlu0 %v504, 96
  %v507 = vpop.permute.xlu0 %506
  %v508 = vsel %vm113, %v507, 0
  %510 = vmatpush.msra.mxu0 0.0
  %511 = vmatpush.msra.mxu0 0.0
  %512 = vmatpush.msra.mxu0 0.0
  %513 = vmatpush.msra.mxu0 0.0
  %514 = vmatpush.msra.mxu0 0.0
  %515 = vmatpush.msra.mxu0 0.0
  %516 = vmatpush.msra.mxu0 0.0
  %517 = vmatpush.msra.mxu0 0.0
  %518 = vmatpush.msra.mxu0 0.0
  %519 = vmatpush.msra.mxu0 0.0
  %520 = vmatpush.msra.mxu0 0.0
  %521 = vmatpush.msra.mxu0 0.0
  %522 = vmatpush.msra.mxu0 %v109
  %523 = vmatpush.msra.mxu0 %v108
  %524 = vmatpush.msra.mxu0 %v107
  %525 = vmatpush.msra.mxu0 %v106
  %526 = vmatmul.f32.gmra.mxu0 %v508
  %v527 = vpop.f32.mrf.mxu0
  %v528 = vadd.f32 0.0, %v527
  %529 = vdwg.mxu0
  %v530 = vadd.f32 %v101, %v528
  %v531 = vxor.u32 %v530, 2147483648
  %v532 = vmul.f32 %v531, 1.442695
  %v533 = vpow.pop %v532
  %v534 = vadd.f32 %v533, 1.0
  %v535 = vrcp.pop %v534
  %v536 = vmul.f32 %v534, %v535
  %v537 = vsub.f32 1.0, %v536
  %v538 = vmul.f32 %v535, %v537
  %v539 = vadd.f32 %v535, %v538
  %vm540 = vweird.f32 %v534
  %vm541 = vweird.f32 %v535
  %vm542 = vmor %vm540, %vm541
  %v543 = vsel %vm542, %v535, %v539
  %v544 = vand.u32 2147483647, %v534
  %vm545 = vcmp.eq.f32.partialorder %v544, 8.507059e+37
  %v546 = vand.u32 %v534, 2147483648
  %v547 = vor.u32 1.1754944e-38, %v546
  %v548 = vsel %vm545, %v547, %v543
  %v549 = vmul.f32 1.0, %v548
  %v550 = vadd.f32 %v528, %v158
  %552 = vrot.lane.b32.xlu0 %v550, 64
  %v553 = vpop.permute.xlu0 %552
  %v555 = vmul.f32 %v549, %v553
  %557 = vrot.lane.b32.xlu0 %v555, 64
  %v558 = vpop.permute.xlu0 %557
  %v560 = vadd.f32 %v101, %v558
  %v561 = vtanh.pop %v560
  %v562 = vsub.f32 1.0, %v549
  %564 = vrot.lane.b32.xlu0 %v561, 96
  %v565 = vpop.permute.xlu0 %564
  %v567 = vmul.f32 %v562, %v565
  %v568 = vmul.f32 %v549, %v504
  %v569 = vadd.f32 %v567, %v568
  %571 = vrot.lane.b32.xlu0 %v569, 96
  %v572 = vpop.permute.xlu0 %571
  %v573 = vsel %vm113, %v572, 0
  %575 = vmatpush.msra.mxu0 0.0
  %576 = vmatpush.msra.mxu0 0.0
  %577 = vmatpush.msra.mxu0 0.0
  %578 = vmatpush.msra.mxu0 0.0
  %579 = vmatpush.msra.mxu0 0.0
  %580 = vmatpush.msra.mxu0 0.0
  %581 = vmatpush.msra.mxu0 0.0
  %582 = vmatpush.msra.mxu0 0.0
  %583 = vmatpush.msra.mxu0 0.0
  %584 = vmatpush.msra.mxu0 0.0
  %585 = vmatpush.msra.mxu0 0.0
  %586 = vmatpush.msra.mxu0 0.0
  %587 = vmatpush.msra.mxu0 %v109
  %588 = vmatpush.msra.mxu0 %v108
  %589 = vmatpush.msra.mxu0 %v107
  %590 = vmatpush.msra.mxu0 %v106
  %591 = vmatmul.f32.gmra.mxu0 %v573
  %v592 = vpop.f32.mrf.mxu0
  %v593 = vadd.f32 0.0, %v592
  %594 = vdwg.mxu0
  %v595 = vadd.f32 %v104, %v593
  %v596 = vxor.u32 %v595, 2147483648
  %v597 = vmul.f32 %v596, 1.442695
  %v598 = vpow.pop %v597
  %v599 = vadd.f32 %v598, 1.0
  %v600 = vrcp.pop %v599
  %v601 = vmul.f32 %v599, %v600
  %v602 = vsub.f32 1.0, %v601
  %v603 = vmul.f32 %v600, %v602
  %v604 = vadd.f32 %v600, %v603
  %vm605 = vweird.f32 %v599
  %vm606 = vweird.f32 %v600
  %vm607 = vmor %vm605, %vm606
  %v608 = vsel %vm607, %v600, %v604
  %v609 = vand.u32 2147483647, %v599
  %vm610 = vcmp.eq.f32.partialorder %v609, 8.507059e+37
  %v611 = vand.u32 %v599, 2147483648
  %v612 = vor.u32 1.1754944e-38, %v611
  %v613 = vsel %vm610, %v612, %v608
  %v614 = vmul.f32 1.0, %v613
  %v615 = vadd.f32 %v593, %v158
  %617 = vrot.lane.b32.xlu0 %v615, 64
  %v618 = vpop.permute.xlu0 %617
  %v620 = vmul.f32 %v614, %v618
  %622 = vrot.lane.b32.xlu0 %v620, 64
  %v623 = vpop.permute.xlu0 %622
  %v625 = vadd.f32 %v104, %v623
  %v626 = vtanh.pop %v625
  %v627 = vsub.f32 1.0, %v614
  %629 = vrot.lane.b32.xlu0 %v626, 96
  %v630 = vpop.permute.xlu0 %629
  %v632 = vmul.f32 %v627, %v630
  %v633 = vmul.f32 %v614, %v569
  %v634 = vadd.f32 %v632, %v633
  %v635 = vld [vmem:[%s5] sm:$0xff]
  %v636 = vld [vmem:[%s5 + $0x8] sm:$0xff]
  %v637 = vld [vmem:[%s5 + $0x10] sm:$0xff]
  %v638 = vld [vmem:[%s5 + $0x18] sm:$0xff]
  %v639 = vld [vmem:[%s6] sm:$0x1]
  %v641 = vperm.slane %v639, 0
  %644 = vrot.lane.b32.xlu0 %v634, 96
  %v645 = vpop.permute.xlu0 %644
  %v646 = vsel %vm113, %v645, 0
  %648 = vmatpush.msra.mxu0 0.0
  %649 = vmatpush.msra.mxu0 0.0
  %650 = vmatpush.msra.mxu0 0.0
  %651 = vmatpush.msra.mxu0 0.0
  %652 = vmatpush.msra.mxu0 0.0
  %653 = vmatpush.msra.mxu0 0.0
  %654 = vmatpush.msra.mxu0 0.0
  %655 = vmatpush.msra.mxu0 0.0
  %656 = vmatpush.msra.mxu0 0.0
  %657 = vmatpush.msra.mxu0 0.0
  %658 = vmatpush.msra.mxu0 0.0
  %659 = vmatpush.msra.mxu0 0.0
  %660 = vmatpush.msra.mxu0 %v638
  %661 = vmatpush.msra.mxu0 %v637
  %662 = vmatpush.msra.mxu0 %v636
  %663 = vmatpush.msra.mxu0 %v635
  %664 = vmatmul.f32.gmra.mxu0 %v646
  %v665 = vpop.f32.mrf.mxu0
  %v666 = vadd.f32 %v641, %v665
  %667 = vdwg.mxu0
  %668 = vst [vmem:[%s7] sm:$0xff] %v666
  // Predicated region
  $region30: #{gru_fc_forward.1} parent=0 // pred_check
    _
  $region31: #{gru_fc_forward.1} parent=0 // pred_check_branch
    %670 = sbr.rel (0) target = $region33
  $region32: #{gru_fc_forward.1} parent=0 // pred_region
    _
  $region33: #{gru_fc_forward.1} parent=0 // pred_fallthru
    _
  // Predicated region
  $region34: #{gru_fc_forward.1} parent=0 // pred_check
    _
  $region35: #{gru_fc_forward.1} parent=0 // pred_check_branch
    %672 = sbr.rel (0) target = $region37
  $region36: #{gru_fc_forward.1} parent=0 // pred_region
    _
  $region37: #{gru_fc_forward.1} parent=0 // pred_fallthru
    _

</llo_original>
